<compile_context>
chip_gen: v7x
topology: tpu7x:2x2x1
jax: 0.10.0
libtpu: 0.0.40
codegen_flags: <defaults>
</compile_context>

<pallas_src>
import jax
import jax.numpy as jnp
from jax.experimental import pallas as pl
from jax.experimental.pallas import tpu as pltpu

NEG_SLOPE = 0.01   # nn.LeakyReLU default negative_slope
BN_EPS = 1e-5      # nn.BatchNorm1d default eps
LANE = 128         # TPU lane width


# ------------------------------ fused kernel --------------------------------

def _build_fused_kernel(kinds):
    """Build a single-shot kernel computing the whole MLP with weights in VMEM.

    kinds: tuple of per-layer tags:
      "hidden_folded" -> refs (w_eff, b_eff, shift)          [BN scale folded into W,b]
      "hidden"        -> refs (w, b, scale, shift)           [fallback, scale not folded]
      "final"         -> refs (w_padded, b_padded)           [lane-dense output columns]
    """

    def kernel(*refs):
        x_ref, o_ref = refs[0], refs[-1]
        params = refs[1:-1]
        h = x_ref[...].astype(jnp.float32)
        i = 0
        for kind in kinds:
            if kind == "hidden_folded":
                w_ref, b_ref, sh_ref = params[i:i + 3]
                i += 3
                y = jnp.dot(h, w_ref[...], preferred_element_type=jnp.float32)
                y = y + b_ref[...]
                y = jnp.where(y >= 0, y, NEG_SLOPE * y)     # LeakyReLU
                h = y + sh_ref[...]                          # BN shift (scale pre-folded)
            elif kind == "hidden":
                w_ref, b_ref, sc_ref, sh_ref = params[i:i + 4]
                i += 4
                y = jnp.dot(h, w_ref[...], preferred_element_type=jnp.float32)
                y = y + b_ref[...]
                y = jnp.where(y >= 0, y, NEG_SLOPE * y)     # LeakyReLU
                h = y * sc_ref[...] + sh_ref[...]            # BN affine (eval)
            else:  # "final"
                w_ref, b_ref = params[i:i + 2]
                i += 2
                h = jnp.dot(h, w_ref[...], preferred_element_type=jnp.float32)
                h = h + b_ref[...]
        o_ref[...] = h.astype(o_ref.dtype)

    return kernel


# --------------------------- parameter preparation ---------------------------

def prepare_fused_params(layers):
    """Fold BN scale into Linear weight/bias (guarded), pad final output lanes.

    Returns (kinds, flat_params, n_pad) where n_pad is the lane-dense padded width
    of the final layer output.
    """
    kinds = []
    flat = []
    n_pad = None
    for kind, params in layers:
        if kind == "hidden":
            w, b, scale, shift = params
            n = w.shape[1]
            if bool(jnp.all(scale > 0)):
                # LeakyReLU(s*y) == s*LeakyReLU(y) for s > 0, so fold scale into W, b.
                kinds.append("hidden_folded")
                flat += [w * scale[None, :],
                         (b * scale).reshape(1, n),
                         shift.reshape(1, n)]
            else:
                kinds.append("hidden")
                flat += [w, b.reshape(1, n), scale.reshape(1, n), shift.reshape(1, n)]
        else:
            w, b = params
            n = w.shape[1]
            n_pad = max(LANE, -(-n // LANE) * LANE)
            if n_pad != n:
                w = jnp.pad(w, ((0, 0), (0, n_pad - n)))
                b = jnp.pad(b, (0, n_pad - n))
            kinds.append("final")
            flat += [w, b.reshape(1, n_pad)]
    return tuple(kinds), flat, n_pad


# ------------------------------- JAX wrapper ---------------------------------

def fc_forward_fused(x, kinds, flat, n_tasks):
    M = x.shape[0]
    n_pad = flat[-1].shape[1]
    kernel = _build_fused_kernel(kinds)
    out = pl.pallas_call(
        kernel,
        out_shape=jax.ShapeDtypeStruct((M, n_pad), x.dtype),
        in_specs=[pl.BlockSpec(memory_space=pltpu.MemorySpace.VMEM)
                  for _ in range(1 + len(flat))],
        out_specs=pl.BlockSpec(memory_space=pltpu.MemorySpace.VMEM),
    )(x, *flat)
    return out[:, :n_tasks]


# ------------------------ parameter init (deterministic) ---------------------

def init_fc_params(key, d_graph_layer, d_FC_layer, n_FC_layer, n_tasks):
    """Mirrors the FC.__init__ ModuleList construction exactly."""

    def linear(k, din, dout):
        kw, kb = jax.random.split(k)
        w = jax.random.normal(kw, (din, dout), jnp.float32) / jnp.sqrt(float(din))
        b = 0.01 * jax.random.normal(kb, (dout,), jnp.float32)
        return w, b

    def batchnorm(k, d):
        kg, kb = jax.random.split(k)
        gamma = 1.0 + 0.1 * jax.random.normal(kg, (d,), jnp.float32)
        beta = 0.1 * jax.random.normal(kb, (d,), jnp.float32)
        running_mean = jnp.zeros((d,), jnp.float32)
        running_var = jnp.ones((d,), jnp.float32)
        scale = gamma / jnp.sqrt(running_var + BN_EPS)
        shift = beta - running_mean * scale
        return scale, shift

    layers = []
    for j in range(n_FC_layer):
        if j == 0:
            key, k1, k2 = jax.random.split(key, 3)
            w, b = linear(k1, d_graph_layer, d_FC_layer)
            s, sh = batchnorm(k2, d_FC_layer)
            layers.append(("hidden", (w, b, s, sh)))
        if j == n_FC_layer - 1:
            key, k1 = jax.random.split(key)
            layers.append(("final", linear(k1, d_FC_layer, n_tasks)))
        else:
            key, k1, k2 = jax.random.split(key, 3)
            w, b = linear(k1, d_FC_layer, d_FC_layer)
            s, sh = batchnorm(k2, d_FC_layer)
            layers.append(("hidden", (w, b, s, sh)))
    return layers


# ------------------------------ pure-JAX references --------------------------

def fc_forward_module_ref(h, layers, precision=None):
    """Literal eval-mode module math (unfolded BN affine)."""
    for kind, params in layers:
        if kind == "hidden":
            w, b, scale, shift = params
            y = jnp.dot(h, w, precision=precision) + b
            y = jnp.where(y >= 0, y, NEG_SLOPE * y)
            h = y * scale + shift
        else:
            w, b = params
            h = jnp.dot(h, w, precision=precision) + b
    return h


def fc_forward_prepared_ref(h, kinds, flat, n_tasks, precision=None):
    """Pure-JAX mirror of the fused kernel's prepared (folded / padded) math."""
    i = 0
    for kind in kinds:
        if kind == "hidden_folded":
            w, b, sh = flat[i:i + 3]
            i += 3
            y = jnp.dot(h, w, precision=precision) + b
            y = jnp.where(y >= 0, y, NEG_SLOPE * y)
            h = y + sh
        elif kind == "hidden":
            w, b, sc, sh = flat[i:i + 4]
            i += 4
            y = jnp.dot(h, w, precision=precision) + b
            y = jnp.where(y >= 0, y, NEG_SLOPE * y)
            h = y * sc + sh
        else:
            w, b = flat[i:i + 2]
            i += 2
            h = jnp.dot(h, w, precision=precision) + b
    return h[:, :n_tasks]


# ---------------------------------- main --------------------------------------

if __name__ == "__main__":
    B = 8
    d_graph_layer = 256
    d_FC_layer = 128
    n_FC_layer = 3
    n_tasks = 4
    dropout = 0.1  # identity in eval-mode forward

    key = jax.random.PRNGKey(0)
    k_in, k_params = jax.random.split(key)
    h = jax.random.normal(k_in, (B, d_graph_layer), jnp.float32)

    layers = init_fc_params(k_params, d_graph_layer, d_FC_layer, n_FC_layer, n_tasks)
    kinds, flat, _ = prepare_fused_params(layers)

    out = fc_forward_fused(h, kinds, flat, n_tasks)
    out = jax.block_until_ready(out)
    assert out.shape == (B, n_tasks), out.shape

    # (1) Kernel matches the prepared math (same params, plain-JAX).
    ref_prep = fc_forward_prepared_ref(h, kinds, flat, n_tasks)
    err_kernel = float(jnp.max(jnp.abs(out - ref_prep)))
    assert err_kernel < 1e-4, f"kernel vs prepared-ref max abs error: {err_kernel}"

    # (2) The scale-fold / lane-pad preparation is exactly the module's eval math
    #     (validated at full f32 matmul precision so the check is precision-independent).
    hp = jax.lax.Precision.HIGHEST
    err_fold = float(jnp.max(jnp.abs(
        fc_forward_prepared_ref(h, kinds, flat, n_tasks, precision=hp)
        - fc_forward_module_ref(h, layers, precision=hp))))
    assert err_fold < 1e-4, f"prepared vs module-literal max abs error: {err_fold}"

    print("KERNEL_OK")
</pallas_src>

<mosaic_0001>
module attributes {stable_mosaic.version = 11 : i64} {
  func.func @kernel(%arg0: memref<8x256xf32, #tpu.memory_space<vmem>>, %arg1: memref<256x128xf32, #tpu.memory_space<vmem>>, %arg2: memref<1x128xf32, #tpu.memory_space<vmem>>, %arg3: memref<1x128xf32, #tpu.memory_space<vmem>>, %arg4: memref<128x128xf32, #tpu.memory_space<vmem>>, %arg5: memref<1x128xf32, #tpu.memory_space<vmem>>, %arg6: memref<1x128xf32, #tpu.memory_space<vmem>>, %arg7: memref<128x128xf32, #tpu.memory_space<vmem>>, %arg8: memref<1x128xf32, #tpu.memory_space<vmem>>, %arg9: memref<1x128xf32, #tpu.memory_space<vmem>>, %arg10: memref<128x128xf32, #tpu.memory_space<vmem>>, %arg11: memref<1x128xf32, #tpu.memory_space<vmem>>, %arg12: memref<8x128xf32, #tpu.memory_space<vmem>>) attributes {dimension_semantics = [], scalar_prefetch = 0 : i64, scratch_operands = 0 : i64, tpu.core_type = #tpu.core_type<tc>} {
    %c0 = arith.constant 0 : index
    %c0_0 = arith.constant 0 : index
    %0 = vector.load %arg0[%c0, %c0_0] : memref<8x256xf32, #tpu.memory_space<vmem>>, vector<8x256xf32>
    %c0_1 = arith.constant 0 : index
    %c0_2 = arith.constant 0 : index
    %1 = vector.load %arg1[%c0_1, %c0_2] : memref<256x128xf32, #tpu.memory_space<vmem>>, vector<256x128xf32>
    %cst = arith.constant dense<0.000000e+00> : vector<8x128xf32>
    %2 = tpu.matmul %0, %1, %cst {dimension_numbers = #tpu.dot_dimension_numbers<[1], [0], [0], [1], [0, 0, 1, 1], [], []>} : vector<8x256xf32>, vector<256x128xf32>, vector<8x128xf32> -> vector<8x128xf32>
    %c0_3 = arith.constant 0 : index
    %c0_4 = arith.constant 0 : index
    %3 = vector.load %arg2[%c0_3, %c0_4] : memref<1x128xf32, #tpu.memory_space<vmem>>, vector<1x128xf32>
    %4 = vector.broadcast %3 : vector<1x128xf32> to vector<8x128xf32>
    %5 = arith.addf %2, %4 : vector<8x128xf32>
    %cst_5 = arith.constant 0.000000e+00 : f32
    %6 = vector.broadcast %cst_5 : f32 to vector<8x128xf32>
    %7 = arith.cmpf oge, %5, %6 : vector<8x128xf32>
    %cst_6 = arith.constant 0.00999999977 : f32
    %8 = vector.broadcast %cst_6 : f32 to vector<8x128xf32>
    %9 = arith.mulf %8, %5 : vector<8x128xf32>
    %10 = arith.select %7, %5, %9 : vector<8x128xi1>, vector<8x128xf32>
    %c0_7 = arith.constant 0 : index
    %c0_8 = arith.constant 0 : index
    %11 = vector.load %arg3[%c0_7, %c0_8] : memref<1x128xf32, #tpu.memory_space<vmem>>, vector<1x128xf32>
    %12 = vector.broadcast %11 : vector<1x128xf32> to vector<8x128xf32>
    %13 = arith.addf %10, %12 : vector<8x128xf32>
    %c0_9 = arith.constant 0 : index
    %c0_10 = arith.constant 0 : index
    %14 = vector.load %arg4[%c0_9, %c0_10] : memref<128x128xf32, #tpu.memory_space<vmem>>, vector<128x128xf32>
    %cst_11 = arith.constant dense<0.000000e+00> : vector<8x128xf32>
    %15 = tpu.matmul %13, %14, %cst_11 {dimension_numbers = #tpu.dot_dimension_numbers<[1], [0], [0], [1], [0, 0, 1, 1], [], []>} : vector<8x128xf32>, vector<128x128xf32>, vector<8x128xf32> -> vector<8x128xf32>
    %c0_12 = arith.constant 0 : index
    %c0_13 = arith.constant 0 : index
    %16 = vector.load %arg5[%c0_12, %c0_13] : memref<1x128xf32, #tpu.memory_space<vmem>>, vector<1x128xf32>
    %17 = vector.broadcast %16 : vector<1x128xf32> to vector<8x128xf32>
    %18 = arith.addf %15, %17 : vector<8x128xf32>
    %cst_14 = arith.constant 0.000000e+00 : f32
    %19 = vector.broadcast %cst_14 : f32 to vector<8x128xf32>
    %20 = arith.cmpf oge, %18, %19 : vector<8x128xf32>
    %cst_15 = arith.constant 0.00999999977 : f32
    %21 = vector.broadcast %cst_15 : f32 to vector<8x128xf32>
    %22 = arith.mulf %21, %18 : vector<8x128xf32>
    %23 = arith.select %20, %18, %22 : vector<8x128xi1>, vector<8x128xf32>
    %c0_16 = arith.constant 0 : index
    %c0_17 = arith.constant 0 : index
    %24 = vector.load %arg6[%c0_16, %c0_17] : memref<1x128xf32, #tpu.memory_space<vmem>>, vector<1x128xf32>
    %25 = vector.broadcast %24 : vector<1x128xf32> to vector<8x128xf32>
    %26 = arith.addf %23, %25 : vector<8x128xf32>
    %c0_18 = arith.constant 0 : index
    %c0_19 = arith.constant 0 : index
    %27 = vector.load %arg7[%c0_18, %c0_19] : memref<128x128xf32, #tpu.memory_space<vmem>>, vector<128x128xf32>
    %cst_20 = arith.constant dense<0.000000e+00> : vector<8x128xf32>
    %28 = tpu.matmul %26, %27, %cst_20 {dimension_numbers = #tpu.dot_dimension_numbers<[1], [0], [0], [1], [0, 0, 1, 1], [], []>} : vector<8x128xf32>, vector<128x128xf32>, vector<8x128xf32> -> vector<8x128xf32>
    %c0_21 = arith.constant 0 : index
    %c0_22 = arith.constant 0 : index
    %29 = vector.load %arg8[%c0_21, %c0_22] : memref<1x128xf32, #tpu.memory_space<vmem>>, vector<1x128xf32>
    %30 = vector.broadcast %29 : vector<1x128xf32> to vector<8x128xf32>
    %31 = arith.addf %28, %30 : vector<8x128xf32>
    %cst_23 = arith.constant 0.000000e+00 : f32
    %32 = vector.broadcast %cst_23 : f32 to vector<8x128xf32>
    %33 = arith.cmpf oge, %31, %32 : vector<8x128xf32>
    %cst_24 = arith.constant 0.00999999977 : f32
    %34 = vector.broadcast %cst_24 : f32 to vector<8x128xf32>
    %35 = arith.mulf %34, %31 : vector<8x128xf32>
    %36 = arith.select %33, %31, %35 : vector<8x128xi1>, vector<8x128xf32>
    %c0_25 = arith.constant 0 : index
    %c0_26 = arith.constant 0 : index
    %37 = vector.load %arg9[%c0_25, %c0_26] : memref<1x128xf32, #tpu.memory_space<vmem>>, vector<1x128xf32>
    %38 = vector.broadcast %37 : vector<1x128xf32> to vector<8x128xf32>
    %39 = arith.addf %36, %38 : vector<8x128xf32>
    %c0_27 = arith.constant 0 : index
    %c0_28 = arith.constant 0 : index
    %40 = vector.load %arg10[%c0_27, %c0_28] : memref<128x128xf32, #tpu.memory_space<vmem>>, vector<128x128xf32>
    %cst_29 = arith.constant dense<0.000000e+00> : vector<8x128xf32>
    %41 = tpu.matmul %39, %40, %cst_29 {dimension_numbers = #tpu.dot_dimension_numbers<[1], [0], [0], [1], [0, 0, 1, 1], [], []>} : vector<8x128xf32>, vector<128x128xf32>, vector<8x128xf32> -> vector<8x128xf32>
    %c0_30 = arith.constant 0 : index
    %c0_31 = arith.constant 0 : index
    %42 = vector.load %arg11[%c0_30, %c0_31] : memref<1x128xf32, #tpu.memory_space<vmem>>, vector<1x128xf32>
    %43 = vector.broadcast %42 : vector<1x128xf32> to vector<8x128xf32>
    %44 = arith.addf %41, %43 : vector<8x128xf32>
    %c0_32 = arith.constant 0 : index
    %c0_33 = arith.constant 0 : index
    %45 = vector.load %arg12[%c0_32, %c0_33] : memref<8x128xf32, #tpu.memory_space<vmem>>, vector<8x128xf32>
    tpu.vector_store %arg12[%c0_32, %c0_33], %44 {strides = array<i32>} : memref<8x128xf32, #tpu.memory_space<vmem>>, vector<8x128xf32>,
    return
  }
}

</mosaic_0001>

<llo_original>
// kernel: tpu_custom_call.1
$region0: #{tpu_custom_call.1}
  #allocation0 [shape = 'u32[]', space=smem, size = 0x4, offset = 0x4, fixed_abs, tag = 'smem constant byte address 0x4 - core index']
  #allocation1 [shape = 'u32[144,128]{1,0:T(1,128)}', space=vmem, size = 0x12000, scoped, tag = 'internal scratch']
  %s0 = inlined_call_operand.hbm [shape: f32[8,256], index: 0, kind: input, shape index: {}]
  %s1 = inlined_call_operand.hbm [shape: f32[256,128], index: 1, kind: input, shape index: {}]
  %s2 = inlined_call_operand.vmem [shape: f32[1,128], index: 2, kind: input, shape index: {}]
  %s3 = inlined_call_operand.vmem [shape: f32[1,128], index: 3, kind: input, shape index: {}]
  %s4 = inlined_call_operand.hbm [shape: f32[128,128], index: 4, kind: input, shape index: {}]
  %s5 = inlined_call_operand.vmem [shape: f32[1,128], index: 5, kind: input, shape index: {}]
  %s6 = inlined_call_operand.vmem [shape: f32[1,128], index: 6, kind: input, shape index: {}]
  %s7 = inlined_call_operand.hbm [shape: f32[128,128], index: 7, kind: input, shape index: {}]
  %s8 = inlined_call_operand.vmem [shape: f32[1,128], index: 8, kind: input, shape index: {}]
  %s9 = inlined_call_operand.vmem [shape: f32[1,128], index: 9, kind: input, shape index: {}]
  %s10 = inlined_call_operand.hbm [shape: f32[128,128], index: 10, kind: input, shape index: {}]
  %s11 = inlined_call_operand.vmem [shape: f32[1,128], index: 11, kind: input, shape index: {}]
  %s12 = inlined_call_operand.hbm [shape: f32[8,128], index: 12, kind: output, shape index: {}]
  %s13 = sld [smem:[#allocation0]]
  $region78: #{tpu_custom_call.1} parent=0
    _
  %s15 = ssub.s32 1, %s13
  %s16 = scalar_select 0, %s15, %s13
  $region1: #{tpu_custom_call.1} parent=0
    #allocation2 [shape = 'u8[8192]{0}', space=vmem, size = 0x2000, scoped, tag = 'input window, operand 0, single buffered']
    #allocation3 [shape = 's32[1]{0}', space=sflag, size = 0x4, scoped, tag = 'scoped memory for tpu_custom_call.1']
    #allocation4 [shape = 's32[1]{0}', space=sflag, size = 0x4, scoped, tag = 'scoped memory for tpu_custom_call.1']
    #allocation5 [shape = 'u8[131072]{0}', space=vmem, size = 0x20000, scoped, tag = 'input window, operand 1, single buffered']
    #allocation6 [shape = 's32[1]{0}', space=sflag, size = 0x4, scoped, tag = 'scoped memory for tpu_custom_call.1']
    #allocation7 [shape = 'u8[65536]{0}', space=vmem, size = 0x10000, scoped, tag = 'input window, operand 4, single buffered']
    #allocation8 [shape = 'u8[65536]{0}', space=vmem, size = 0x10000, scoped, tag = 'input window, operand 7, single buffered']
    #allocation9 [shape = 's32[1]{0}', space=sflag, size = 0x4, scoped, tag = 'scoped memory for tpu_custom_call.1']
    #allocation10 [shape = 'u8[65536]{0}', space=vmem, size = 0x10000, scoped, tag = 'input window, operand 10, single buffered']
    #allocation11 [shape = 'u8[4096]{0}', space=vmem, size = 0x1000, scoped, tag = 'output window, operand 0, single buffered']
    %17 = vsyncpa [#allocation3], 0
    %18 = vsyncpa [#allocation6], 0
    %19 = vsyncpa [#allocation9], 0
    %20 = vsyncpa [#allocation4], 0
    // Predicated region
    $region2: #{tpu_custom_call.1} parent=1 // pred_check
      _
    $region3: #{tpu_custom_call.1} parent=1 // pred_check_branch
      %22 = sbr.rel (0) target = $region5
    $region4: #{tpu_custom_call.1} parent=1 // pred_region
      %s24 = ssub.s32 256, 256
      %25 = vsyncadd [#allocation3], %s24
      %s27 = sshll.u32 [#allocation2], 4
      %s28 = int_to_ptr.vmem [resolvable:$true] %s27
      %30 = dma.hbm_to_vmem [thread:$0]  %s0, 256, %s28, [#allocation3]
    $region5: #{tpu_custom_call.1} parent=1 // pred_fallthru
      _
    // Predicated region
    $region6: #{tpu_custom_call.1} parent=1 // pred_check
      _
    $region7: #{tpu_custom_call.1} parent=1 // pred_check_branch
      %32 = sbr.rel (0) target = $region9
    $region8: #{tpu_custom_call.1} parent=1 // pred_region
      %s34 = ssub.s32 4096, 4096
      %35 = vsyncadd [#allocation6], %s34
      %s36 = sshll.u32 [#allocation5], 4
      %s37 = int_to_ptr.vmem [resolvable:$true] %s36
      %42 = dma.hbm_to_vmem [thread:$0]  %s1, 4096, %s37, [#allocation6], 128, 128, 8
    $region9: #{tpu_custom_call.1} parent=1 // pred_fallthru
      _
    // Predicated region
    $region10: #{tpu_custom_call.1} parent=1 // pred_check
      _
    $region11: #{tpu_custom_call.1} parent=1 // pred_check_branch
      %44 = sbr.rel (0) target = $region13
    $region12: #{tpu_custom_call.1} parent=1 // pred_region
      _
    $region13: #{tpu_custom_call.1} parent=1 // pred_fallthru
      _
    // Predicated region
    $region14: #{tpu_custom_call.1} parent=1 // pred_check
      _
    $region15: #{tpu_custom_call.1} parent=1 // pred_check_branch
      %46 = sbr.rel (0) target = $region17
    $region16: #{tpu_custom_call.1} parent=1 // pred_region
      _
    $region17: #{tpu_custom_call.1} parent=1 // pred_fallthru
      _
    // Predicated region
    $region18: #{tpu_custom_call.1} parent=1 // pred_check
      _
    $region19: #{tpu_custom_call.1} parent=1 // pred_check_branch
      %48 = sbr.rel (0) target = $region21
    $region20: #{tpu_custom_call.1} parent=1 // pred_region
      %s50 = ssub.s32 2048, 2048
      %51 = vsyncadd [#allocation6], %s50
      %s52 = sshll.u32 [#allocation7], 4
      %s53 = int_to_ptr.vmem [resolvable:$true] %s52
      %58 = dma.hbm_to_vmem [thread:$0]  %s4, 2048, %s53, [#allocation6], 128, 128, 8
    $region21: #{tpu_custom_call.1} parent=1 // pred_fallthru
      _
    // Predicated region
    $region22: #{tpu_custom_call.1} parent=1 // pred_check
      _
    $region23: #{tpu_custom_call.1} parent=1 // pred_check_branch
      %60 = sbr.rel (0) target = $region25
    $region24: #{tpu_custom_call.1} parent=1 // pred_region
      _
    $region25: #{tpu_custom_call.1} parent=1 // pred_fallthru
      _
    // Predicated region
    $region26: #{tpu_custom_call.1} parent=1 // pred_check
      _
    $region27: #{tpu_custom_call.1} parent=1 // pred_check_branch
      %62 = sbr.rel (0) target = $region29
    $region28: #{tpu_custom_call.1} parent=1 // pred_region
      _
    $region29: #{tpu_custom_call.1} parent=1 // pred_fallthru
      _
    // Predicated region
    $region30: #{tpu_custom_call.1} parent=1 // pred_check
      _
    $region31: #{tpu_custom_call.1} parent=1 // pred_check_branch
      %64 = sbr.rel (0) target = $region33
    $region32: #{tpu_custom_call.1} parent=1 // pred_region
      %s66 = ssub.s32 2048, 2048
      %67 = vsyncadd [#allocation9], %s66
      %s68 = sshll.u32 [#allocation8], 4
      %s69 = int_to_ptr.vmem [resolvable:$true] %s68
      %74 = dma.hbm_to_vmem [thread:$0]  %s7, 2048, %s69, [#allocation9], 128, 128, 8
    $region33: #{tpu_custom_call.1} parent=1 // pred_fallthru
      _
    // Predicated region
    $region34: #{tpu_custom_call.1} parent=1 // pred_check
      _
    $region35: #{tpu_custom_call.1} parent=1 // pred_check_branch
      %76 = sbr.rel (0) target = $region37
    $region36: #{tpu_custom_call.1} parent=1 // pred_region
      _
    $region37: #{tpu_custom_call.1} parent=1 // pred_fallthru
      _
    // Predicated region
    $region38: #{tpu_custom_call.1} parent=1 // pred_check
      _
    $region39: #{tpu_custom_call.1} parent=1 // pred_check_branch
      %78 = sbr.rel (0) target = $region41
    $region40: #{tpu_custom_call.1} parent=1 // pred_region
      _
    $region41: #{tpu_custom_call.1} parent=1 // pred_fallthru
      _
    // Predicated region
    $region42: #{tpu_custom_call.1} parent=1 // pred_check
      _
    $region43: #{tpu_custom_call.1} parent=1 // pred_check_branch
      %80 = sbr.rel (0) target = $region45
    $region44: #{tpu_custom_call.1} parent=1 // pred_region
      %s82 = ssub.s32 2048, 2048
      %83 = vsyncadd [#allocation9], %s82
      %s84 = sshll.u32 [#allocation10], 4
      %s85 = int_to_ptr.vmem [resolvable:$true] %s84
      %90 = dma.hbm_to_vmem [thread:$0]  %s10, 2048, %s85, [#allocation9], 128, 128, 8
    $region45: #{tpu_custom_call.1} parent=1 // pred_fallthru
      _
    // Predicated region
    $region46: #{tpu_custom_call.1} parent=1 // pred_check
      _
    $region47: #{tpu_custom_call.1} parent=1 // pred_check_branch
      %92 = sbr.rel (0) target = $region49
    $region48: #{tpu_custom_call.1} parent=1 // pred_region
      _
    $region49: #{tpu_custom_call.1} parent=1 // pred_fallthru
      _
    // Predicated region
    $region50: #{tpu_custom_call.1} parent=1 // pred_check
      _
    $region51: #{tpu_custom_call.1} parent=1 // pred_check_branch
      %94 = sbr.rel (0) target = $region53
    $region52: #{tpu_custom_call.1} parent=1 // pred_region
      %95 = dma.done [#allocation3], 256
    $region53: #{tpu_custom_call.1} parent=1 // pred_fallthru
      _
    // Predicated region
    $region54: #{tpu_custom_call.1} parent=1 // pred_check
      _
    $region55: #{tpu_custom_call.1} parent=1 // pred_check_branch
      %97 = sbr.rel (0) target = $region57
    $region56: #{tpu_custom_call.1} parent=1 // pred_region
      %98 = dma.done [#allocation6], 4096
    $region57: #{tpu_custom_call.1} parent=1 // pred_fallthru
      _
    // Predicated region
    $region58: #{tpu_custom_call.1} parent=1 // pred_check
      _
    $region59: #{tpu_custom_call.1} parent=1 // pred_check_branch
      %100 = sbr.rel (0) target = $region61
    $region60: #{tpu_custom_call.1} parent=1 // pred_region
      %101 = dma.done [#allocation6], 2048
    $region61: #{tpu_custom_call.1} parent=1 // pred_fallthru
      _
    // Predicated region
    $region62: #{tpu_custom_call.1} parent=1 // pred_check
      _
    $region63: #{tpu_custom_call.1} parent=1 // pred_check_branch
      %103 = sbr.rel (0) target = $region65
    $region64: #{tpu_custom_call.1} parent=1 // pred_region
      %104 = dma.done [#allocation9], 2048
    $region65: #{tpu_custom_call.1} parent=1 // pred_fallthru
      _
    // Predicated region
    $region66: #{tpu_custom_call.1} parent=1 // pred_check
      _
    $region67: #{tpu_custom_call.1} parent=1 // pred_check_branch
      %106 = sbr.rel (0) target = $region69
    $region68: #{tpu_custom_call.1} parent=1 // pred_region
      %107 = dma.done [#allocation9], 2048
    $region69: #{tpu_custom_call.1} parent=1 // pred_fallthru
      _
    %v108 = vld [vmem:[#allocation2] sm:$0xff]
    %v109 = vld [vmem:[#allocation2 + $0x8] sm:$0xff]
    %v110 = vld [vmem:[#allocation5] sm:$0xff]
    %v111 = vld [vmem:[#allocation5 + $0x8] sm:$0xff]
    %v112 = vld [vmem:[#allocation5 + $0x10] sm:$0xff]
    %v113 = vld [vmem:[#allocation5 + $0x18] sm:$0xff]
    %v114 = vld [vmem:[#allocation5 + $0x20] sm:$0xff]
    %v115 = vld [vmem:[#allocation5 + $0x28] sm:$0xff]
    %v116 = vld [vmem:[#allocation5 + $0x30] sm:$0xff]
    %v117 = vld [vmem:[#allocation5 + $0x38] sm:$0xff]
    %v118 = vld [vmem:[#allocation5 + $0x40] sm:$0xff]
    %v119 = vld [vmem:[#allocation5 + $0x48] sm:$0xff]
    %v120 = vld [vmem:[#allocation5 + $0x50] sm:$0xff]
    %v121 = vld [vmem:[#allocation5 + $0x58] sm:$0xff]
    %v122 = vld [vmem:[#allocation5 + $0x60] sm:$0xff]
    %v123 = vld [vmem:[#allocation5 + $0x68] sm:$0xff]
    %v124 = vld [vmem:[#allocation5 + $0x70] sm:$0xff]
    %v125 = vld [vmem:[#allocation5 + $0x78] sm:$0xff]
    %v126 = vld [vmem:[#allocation5 + $0x80] sm:$0xff]
    %v127 = vld [vmem:[#allocation5 + $0x88] sm:$0xff]
    %v128 = vld [vmem:[#allocation5 + $0x90] sm:$0xff]
    %v129 = vld [vmem:[#allocation5 + $0x98] sm:$0xff]
    %v130 = vld [vmem:[#allocation5 + $0xa0] sm:$0xff]
    %v131 = vld [vmem:[#allocation5 + $0xa8] sm:$0xff]
    %v132 = vld [vmem:[#allocation5 + $0xb0] sm:$0xff]
    %v133 = vld [vmem:[#allocation5 + $0xb8] sm:$0xff]
    %v134 = vld [vmem:[#allocation5 + $0xc0] sm:$0xff]
    %v135 = vld [vmem:[#allocation5 + $0xc8] sm:$0xff]
    %v136 = vld [vmem:[#allocation5 + $0xd0] sm:$0xff]
    %v137 = vld [vmem:[#allocation5 + $0xd8] sm:$0xff]
    %v138 = vld [vmem:[#allocation5 + $0xe0] sm:$0xff]
    %v139 = vld [vmem:[#allocation5 + $0xe8] sm:$0xff]
    %v140 = vld [vmem:[#allocation5 + $0xf0] sm:$0xff]
    %v141 = vld [vmem:[#allocation5 + $0xf8] sm:$0xff]
    %v142 = vld [vmem:[%s2] sm:$0x1]
    %v144 = vlaneseq
    %v145 = vshrl.u32 %v144, 7
    %v146 = vsub.s32 0, %v145
    %v147 = vrot.slane %v142, %v146
    %149 = vmatprep.subr.mxu0 0.0
    %150 = vmatpush1.msra.mxu0 %v110
    %151 = vmatprep.subr.mxu0 0.0
    %152 = vmatpush1.msra.mxu0 %v111
    %153 = vmatprep.subr.mxu0 0.0
    %154 = vmatpush1.msra.mxu0 %v112
    %155 = vmatprep.subr.mxu0 0.0
    %156 = vmatpush1.msra.mxu0 %v113
    %157 = vmatprep.subr.mxu0 0.0
    %158 = vmatpush1.msra.mxu0 %v114
    %159 = vmatprep.subr.mxu0 0.0
    %160 = vmatpush1.msra.mxu0 %v115
    %161 = vmatprep.subr.mxu0 0.0
    %162 = vmatpush1.msra.mxu0 %v116
    %163 = vmatprep.subr.mxu0 0.0
    %164 = vmatpush1.msra.mxu0 %v117
    %165 = vmatprep.subr.mxu0 0.0
    %166 = vmatpush1.msra.mxu0 %v118
    %167 = vmatprep.subr.mxu0 0.0
    %168 = vmatpush1.msra.mxu0 %v119
    %169 = vmatprep.subr.mxu0 0.0
    %170 = vmatpush1.msra.mxu0 %v120
    %171 = vmatprep.subr.mxu0 0.0
    %172 = vmatpush1.msra.mxu0 %v121
    %173 = vmatprep.subr.mxu0 0.0
    %174 = vmatpush1.msra.mxu0 %v122
    %175 = vmatprep.subr.mxu0 0.0
    %176 = vmatpush1.msra.mxu0 %v123
    %177 = vmatprep.subr.mxu0 0.0
    %178 = vmatpush1.msra.mxu0 %v124
    %179 = vmatprep.subr.mxu0 0.0
    %180 = vmatpush1.msra.mxu0 %v125
    %181 = vmatprep.subr.mxu0 0.0
    %182 = vmatpush1.msra.mxu0 %v126
    %183 = vmatprep.subr.mxu0 0.0
    %184 = vmatpush1.msra.mxu0 %v127
    %185 = vmatprep.subr.mxu0 0.0
    %186 = vmatpush1.msra.mxu0 %v128
    %187 = vmatprep.subr.mxu0 0.0
    %188 = vmatpush1.msra.mxu0 %v129
    %189 = vmatprep.subr.mxu0 0.0
    %190 = vmatpush1.msra.mxu0 %v130
    %191 = vmatprep.subr.mxu0 0.0
    %192 = vmatpush1.msra.mxu0 %v131
    %193 = vmatprep.subr.mxu0 0.0
    %194 = vmatpush1.msra.mxu0 %v132
    %195 = vmatprep.subr.mxu0 0.0
    %196 = vmatpush1.msra.mxu0 %v133
    %197 = vmatprep.subr.mxu0 0.0
    %198 = vmatpush1.msra.mxu0 %v134
    %199 = vmatprep.subr.mxu0 0.0
    %200 = vmatpush1.msra.mxu0 %v135
    %201 = vmatprep.subr.mxu0 0.0
    %202 = vmatpush1.msra.mxu0 %v136
    %203 = vmatprep.subr.mxu0 0.0
    %204 = vmatpush1.msra.mxu0 %v137
    %205 = vmatprep.subr.mxu0 0.0
    %206 = vmatpush1.msra.mxu0 %v138
    %207 = vmatprep.subr.mxu0 0.0
    %208 = vmatpush1.msra.mxu0 %v139
    %209 = vmatprep.subr.mxu0 0.0
    %210 = vmatpush1.msra.mxu0 %v140
    %211 = vmatprep.subr.mxu0 0.0
    %212 = vmatpush1.msra.mxu0 %v141
    %213 = vmatprep.mubr.f32.mxu0 %v109
    %214 = vmatmul.mubr.f32.gmra.mrb[0].mxu0 %v108
    %v215 = vpop.f32.mrb[0].mxu0
    %v216 = vadd.f32 %v147, %v215
    %v217 = vpop.f32.mrb[0].mxu0
    %218 = vdwg.mxu0
    %vm219 = vcmp.ge.f32.partialorder %v216, 0.0
    %v220 = vmul.f32 %v216, 0.01
    %v221 = vsel %vm219, %v216, %v220
    %v222 = vld [vmem:[%s3] sm:$0x1]
    %v224 = vlaneseq
    %v225 = vshrl.u32 %v224, 7
    %v226 = vsub.s32 0, %v225
    %v227 = vrot.slane %v222, %v226
    %v229 = vadd.f32 %v221, %v227
    %v230 = vld [vmem:[#allocation7] sm:$0xff]
    %v231 = vld [vmem:[#allocation7 + $0x8] sm:$0xff]
    %v232 = vld [vmem:[#allocation7 + $0x10] sm:$0xff]
    %v233 = vld [vmem:[#allocation7 + $0x18] sm:$0xff]
    %v234 = vld [vmem:[#allocation7 + $0x20] sm:$0xff]
    %v235 = vld [vmem:[#allocation7 + $0x28] sm:$0xff]
    %v236 = vld [vmem:[#allocation7 + $0x30] sm:$0xff]
    %v237 = vld [vmem:[#allocation7 + $0x38] sm:$0xff]
    %v238 = vld [vmem:[#allocation7 + $0x40] sm:$0xff]
    %v239 = vld [vmem:[#allocation7 + $0x48] sm:$0xff]
    %v240 = vld [vmem:[#allocation7 + $0x50] sm:$0xff]
    %v241 = vld [vmem:[#allocation7 + $0x58] sm:$0xff]
    %v242 = vld [vmem:[#allocation7 + $0x60] sm:$0xff]
    %v243 = vld [vmem:[#allocation7 + $0x68] sm:$0xff]
    %v244 = vld [vmem:[#allocation7 + $0x70] sm:$0xff]
    %v245 = vld [vmem:[#allocation7 + $0x78] sm:$0xff]
    %v246 = vld [vmem:[%s5] sm:$0x1]
    %v248 = vlaneseq
    %v249 = vshrl.u32 %v248, 7
    %v250 = vsub.s32 0, %v249
    %v251 = vrot.slane %v246, %v250
    %253 = vmatprep.subr.mxu0 0.0
    %254 = vmatpush1.msra.mxu0 %v230
    %255 = vmatprep.subr.mxu0 0.0
    %256 = vmatpush1.msra.mxu0 %v231
    %257 = vmatprep.subr.mxu0 0.0
    %258 = vmatpush1.msra.mxu0 %v232
    %259 = vmatprep.subr.mxu0 0.0
    %260 = vmatpush1.msra.mxu0 %v233
    %261 = vmatprep.subr.mxu0 0.0
    %262 = vmatpush1.msra.mxu0 %v234
    %263 = vmatprep.subr.mxu0 0.0
    %264 = vmatpush1.msra.mxu0 %v235
    %265 = vmatprep.subr.mxu0 0.0
    %266 = vmatpush1.msra.mxu0 %v236
    %267 = vmatprep.subr.mxu0 0.0
    %268 = vmatpush1.msra.mxu0 %v237
    %269 = vmatprep.subr.mxu0 0.0
    %270 = vmatpush1.msra.mxu0 %v238
    %271 = vmatprep.subr.mxu0 0.0
    %272 = vmatpush1.msra.mxu0 %v239
    %273 = vmatprep.subr.mxu0 0.0
    %274 = vmatpush1.msra.mxu0 %v240
    %275 = vmatprep.subr.mxu0 0.0
    %276 = vmatpush1.msra.mxu0 %v241
    %277 = vmatprep.subr.mxu0 0.0
    %278 = vmatpush1.msra.mxu0 %v242
    %279 = vmatprep.subr.mxu0 0.0
    %280 = vmatpush1.msra.mxu0 %v243
    %281 = vmatprep.subr.mxu0 0.0
    %282 = vmatpush1.msra.mxu0 %v244
    %283 = vmatprep.subr.mxu0 0.0
    %284 = vmatpush1.msra.mxu0 %v245
    %285 = vmatprep.subr.mxu0 0.0
    %286 = vmatpush1.msra.mxu0 0.0
    %287 = vmatprep.subr.mxu0 0.0
    %288 = vmatpush1.msra.mxu0 0.0
    %289 = vmatprep.subr.mxu0 0.0
    %290 = vmatpush1.msra.mxu0 0.0
    %291 = vmatprep.subr.mxu0 0.0
    %292 = vmatpush1.msra.mxu0 0.0
    %293 = vmatprep.subr.mxu0 0.0
    %294 = vmatpush1.msra.mxu0 0.0
    %295 = vmatprep.subr.mxu0 0.0
    %296 = vmatpush1.msra.mxu0 0.0
    %297 = vmatprep.subr.mxu0 0.0
    %298 = vmatpush1.msra.mxu0 0.0
    %299 = vmatprep.subr.mxu0 0.0
    %300 = vmatpush1.msra.mxu0 0.0
    %301 = vmatprep.subr.mxu0 0.0
    %302 = vmatpush1.msra.mxu0 0.0
    %303 = vmatprep.subr.mxu0 0.0
    %304 = vmatpush1.msra.mxu0 0.0
    %305 = vmatprep.subr.mxu0 0.0
    %306 = vmatpush1.msra.mxu0 0.0
    %307 = vmatprep.subr.mxu0 0.0
    %308 = vmatpush1.msra.mxu0 0.0
    %309 = vmatprep.subr.mxu0 0.0
    %310 = vmatpush1.msra.mxu0 0.0
    %311 = vmatprep.subr.mxu0 0.0
    %312 = vmatpush1.msra.mxu0 0.0
    %313 = vmatprep.subr.mxu0 0.0
    %314 = vmatpush1.msra.mxu0 0.0
    %315 = vmatprep.subr.mxu0 0.0
    %316 = vmatpush1.msra.mxu0 0.0
    %317 = vmatprep.mubr.f32.mxu0 0.0
    %318 = vmatmul.mubr.f32.gmra.mrb[0].mxu0 %v229
    %v319 = vpop.f32.mrb[0].mxu0
    %v320 = vadd.f32 %v251, %v319
    %v321 = vpop.f32.mrb[0].mxu0
    %322 = vdwg.mxu0
    %vm323 = vcmp.ge.f32.partialorder %v320, 0.0
    %v324 = vmul.f32 %v320, 0.01
    %v325 = vsel %vm323, %v320, %v324
    %v326 = vld [vmem:[%s6] sm:$0x1]
    %v328 = vlaneseq
    %v329 = vshrl.u32 %v328, 7
    %v330 = vsub.s32 0, %v329
    %v331 = vrot.slane %v326, %v330
    %v333 = vadd.f32 %v325, %v331
    %v334 = vld [vmem:[#allocation8] sm:$0xff]
    %v335 = vld [vmem:[#allocation8 + $0x8] sm:$0xff]
    %v336 = vld [vmem:[#allocation8 + $0x10] sm:$0xff]
    %v337 = vld [vmem:[#allocation8 + $0x18] sm:$0xff]
    %v338 = vld [vmem:[#allocation8 + $0x20] sm:$0xff]
    %v339 = vld [vmem:[#allocation8 + $0x28] sm:$0xff]
    %v340 = vld [vmem:[#allocation8 + $0x30] sm:$0xff]
    %v341 = vld [vmem:[#allocation8 + $0x38] sm:$0xff]
    %v342 = vld [vmem:[#allocation8 + $0x40] sm:$0xff]
    %v343 = vld [vmem:[#allocation8 + $0x48] sm:$0xff]
    %v344 = vld [vmem:[#allocation8 + $0x50] sm:$0xff]
    %v345 = vld [vmem:[#allocation8 + $0x58] sm:$0xff]
    %v346 = vld [vmem:[#allocation8 + $0x60] sm:$0xff]
    %v347 = vld [vmem:[#allocation8 + $0x68] sm:$0xff]
    %v348 = vld [vmem:[#allocation8 + $0x70] sm:$0xff]
    %v349 = vld [vmem:[#allocation8 + $0x78] sm:$0xff]
    %v350 = vld [vmem:[%s8] sm:$0x1]
    %v352 = vlaneseq
    %v353 = vshrl.u32 %v352, 7
    %v354 = vsub.s32 0, %v353
    %v355 = vrot.slane %v350, %v354
    %357 = vmatprep.subr.mxu0 0.0
    %358 = vmatpush1.msra.mxu0 %v334
    %359 = vmatprep.subr.mxu0 0.0
    %360 = vmatpush1.msra.mxu0 %v335
    %361 = vmatprep.subr.mxu0 0.0
    %362 = vmatpush1.msra.mxu0 %v336
    %363 = vmatprep.subr.mxu0 0.0
    %364 = vmatpush1.msra.mxu0 %v337
    %365 = vmatprep.subr.mxu0 0.0
    %366 = vmatpush1.msra.mxu0 %v338
    %367 = vmatprep.subr.mxu0 0.0
    %368 = vmatpush1.msra.mxu0 %v339
    %369 = vmatprep.subr.mxu0 0.0
    %370 = vmatpush1.msra.mxu0 %v340
    %371 = vmatprep.subr.mxu0 0.0
    %372 = vmatpush1.msra.mxu0 %v341
    %373 = vmatprep.subr.mxu0 0.0
    %374 = vmatpush1.msra.mxu0 %v342
    %375 = vmatprep.subr.mxu0 0.0
    %376 = vmatpush1.msra.mxu0 %v343
    %377 = vmatprep.subr.mxu0 0.0
    %378 = vmatpush1.msra.mxu0 %v344
    %379 = vmatprep.subr.mxu0 0.0
    %380 = vmatpush1.msra.mxu0 %v345
    %381 = vmatprep.subr.mxu0 0.0
    %382 = vmatpush1.msra.mxu0 %v346
    %383 = vmatprep.subr.mxu0 0.0
    %384 = vmatpush1.msra.mxu0 %v347
    %385 = vmatprep.subr.mxu0 0.0
    %386 = vmatpush1.msra.mxu0 %v348
    %387 = vmatprep.subr.mxu0 0.0
    %388 = vmatpush1.msra.mxu0 %v349
    %389 = vmatprep.subr.mxu0 0.0
    %390 = vmatpush1.msra.mxu0 0.0
    %391 = vmatprep.subr.mxu0 0.0
    %392 = vmatpush1.msra.mxu0 0.0
    %393 = vmatprep.subr.mxu0 0.0
    %394 = vmatpush1.msra.mxu0 0.0
    %395 = vmatprep.subr.mxu0 0.0
    %396 = vmatpush1.msra.mxu0 0.0
    %397 = vmatprep.subr.mxu0 0.0
    %398 = vmatpush1.msra.mxu0 0.0
    %399 = vmatprep.subr.mxu0 0.0
    %400 = vmatpush1.msra.mxu0 0.0
    %401 = vmatprep.subr.mxu0 0.0
    %402 = vmatpush1.msra.mxu0 0.0
    %403 = vmatprep.subr.mxu0 0.0
    %404 = vmatpush1.msra.mxu0 0.0
    %405 = vmatprep.subr.mxu0 0.0
    %406 = vmatpush1.msra.mxu0 0.0
    %407 = vmatprep.subr.mxu0 0.0
    %408 = vmatpush1.msra.mxu0 0.0
    %409 = vmatprep.subr.mxu0 0.0
    %410 = vmatpush1.msra.mxu0 0.0
    %411 = vmatprep.subr.mxu0 0.0
    %412 = vmatpush1.msra.mxu0 0.0
    %413 = vmatprep.subr.mxu0 0.0
    %414 = vmatpush1.msra.mxu0 0.0
    %415 = vmatprep.subr.mxu0 0.0
    %416 = vmatpush1.msra.mxu0 0.0
    %417 = vmatprep.subr.mxu0 0.0
    %418 = vmatpush1.msra.mxu0 0.0
    %419 = vmatprep.subr.mxu0 0.0
    %420 = vmatpush1.msra.mxu0 0.0
    %421 = vmatprep.mubr.f32.mxu0 0.0
    %422 = vmatmul.mubr.f32.gmra.mrb[0].mxu0 %v333
    %v423 = vpop.f32.mrb[0].mxu0
    %v424 = vadd.f32 %v355, %v423
    %v425 = vpop.f32.mrb[0].mxu0
    %426 = vdwg.mxu0
    %vm427 = vcmp.ge.f32.partialorder %v424, 0.0
    %v428 = vmul.f32 %v424, 0.01
    %v429 = vsel %vm427, %v424, %v428
    %v430 = vld [vmem:[%s9] sm:$0x1]
    %v432 = vlaneseq
    %v433 = vshrl.u32 %v432, 7
    %v434 = vsub.s32 0, %v433
    %v435 = vrot.slane %v430, %v434
    %v437 = vadd.f32 %v429, %v435
    %v438 = vld [vmem:[#allocation10] sm:$0xff]
    %v439 = vld [vmem:[#allocation10 + $0x8] sm:$0xff]
    %v440 = vld [vmem:[#allocation10 + $0x10] sm:$0xff]
    %v441 = vld [vmem:[#allocation10 + $0x18] sm:$0xff]
    %v442 = vld [vmem:[#allocation10 + $0x20] sm:$0xff]
    %v443 = vld [vmem:[#allocation10 + $0x28] sm:$0xff]
    %v444 = vld [vmem:[#allocation10 + $0x30] sm:$0xff]
    %v445 = vld [vmem:[#allocation10 + $0x38] sm:$0xff]
    %v446 = vld [vmem:[#allocation10 + $0x40] sm:$0xff]
    %v447 = vld [vmem:[#allocation10 + $0x48] sm:$0xff]
    %v448 = vld [vmem:[#allocation10 + $0x50] sm:$0xff]
    %v449 = vld [vmem:[#allocation10 + $0x58] sm:$0xff]
    %v450 = vld [vmem:[#allocation10 + $0x60] sm:$0xff]
    %v451 = vld [vmem:[#allocation10 + $0x68] sm:$0xff]
    %v452 = vld [vmem:[#allocation10 + $0x70] sm:$0xff]
    %v453 = vld [vmem:[#allocation10 + $0x78] sm:$0xff]
    %v454 = vld [vmem:[%s11] sm:$0x1]
    %v456 = vlaneseq
    %v457 = vshrl.u32 %v456, 7
    %v458 = vsub.s32 0, %v457
    %v459 = vrot.slane %v454, %v458
    %461 = vmatprep.subr.mxu0 0.0
    %462 = vmatpush1.msra.mxu0 %v438
    %463 = vmatprep.subr.mxu0 0.0
    %464 = vmatpush1.msra.mxu0 %v439
    %465 = vmatprep.subr.mxu0 0.0
    %466 = vmatpush1.msra.mxu0 %v440
    %467 = vmatprep.subr.mxu0 0.0
    %468 = vmatpush1.msra.mxu0 %v441
    %469 = vmatprep.subr.mxu0 0.0
    %470 = vmatpush1.msra.mxu0 %v442
    %471 = vmatprep.subr.mxu0 0.0
    %472 = vmatpush1.msra.mxu0 %v443
    %473 = vmatprep.subr.mxu0 0.0
    %474 = vmatpush1.msra.mxu0 %v444
    %475 = vmatprep.subr.mxu0 0.0
    %476 = vmatpush1.msra.mxu0 %v445
    %477 = vmatprep.subr.mxu0 0.0
    %478 = vmatpush1.msra.mxu0 %v446
    %479 = vmatprep.subr.mxu0 0.0
    %480 = vmatpush1.msra.mxu0 %v447
    %481 = vmatprep.subr.mxu0 0.0
    %482 = vmatpush1.msra.mxu0 %v448
    %483 = vmatprep.subr.mxu0 0.0
    %484 = vmatpush1.msra.mxu0 %v449
    %485 = vmatprep.subr.mxu0 0.0
    %486 = vmatpush1.msra.mxu0 %v450
    %487 = vmatprep.subr.mxu0 0.0
    %488 = vmatpush1.msra.mxu0 %v451
    %489 = vmatprep.subr.mxu0 0.0
    %490 = vmatpush1.msra.mxu0 %v452
    %491 = vmatprep.subr.mxu0 0.0
    %492 = vmatpush1.msra.mxu0 %v453
    %493 = vmatprep.subr.mxu0 0.0
    %494 = vmatpush1.msra.mxu0 0.0
    %495 = vmatprep.subr.mxu0 0.0
    %496 = vmatpush1.msra.mxu0 0.0
    %497 = vmatprep.subr.mxu0 0.0
    %498 = vmatpush1.msra.mxu0 0.0
    %499 = vmatprep.subr.mxu0 0.0
    %500 = vmatpush1.msra.mxu0 0.0
    %501 = vmatprep.subr.mxu0 0.0
    %502 = vmatpush1.msra.mxu0 0.0
    %503 = vmatprep.subr.mxu0 0.0
    %504 = vmatpush1.msra.mxu0 0.0
    %505 = vmatprep.subr.mxu0 0.0
    %506 = vmatpush1.msra.mxu0 0.0
    %507 = vmatprep.subr.mxu0 0.0
    %508 = vmatpush1.msra.mxu0 0.0
    %509 = vmatprep.subr.mxu0 0.0
    %510 = vmatpush1.msra.mxu0 0.0
    %511 = vmatprep.subr.mxu0 0.0
    %512 = vmatpush1.msra.mxu0 0.0
    %513 = vmatprep.subr.mxu0 0.0
    %514 = vmatpush1.msra.mxu0 0.0
    %515 = vmatprep.subr.mxu0 0.0
    %516 = vmatpush1.msra.mxu0 0.0
    %517 = vmatprep.subr.mxu0 0.0
    %518 = vmatpush1.msra.mxu0 0.0
    %519 = vmatprep.subr.mxu0 0.0
    %520 = vmatpush1.msra.mxu0 0.0
    %521 = vmatprep.subr.mxu0 0.0
    %522 = vmatpush1.msra.mxu0 0.0
    %523 = vmatprep.subr.mxu0 0.0
    %524 = vmatpush1.msra.mxu0 0.0
    %525 = vmatprep.mubr.f32.mxu0 0.0
    %526 = vmatmul.mubr.f32.gmra.mrb[0].mxu0 %v437
    %v527 = vpop.f32.mrb[0].mxu0
    %v528 = vadd.f32 %v459, %v527
    %v529 = vpop.f32.mrb[0].mxu0
    %530 = vdwg.mxu0
    %531 = vst [vmem:[#allocation11] sm:$0xff] %v528
    // Predicated region
    $region70: #{tpu_custom_call.1} parent=1 // pred_check
      _
    $region71: #{tpu_custom_call.1} parent=1 // pred_check_branch
      %533 = sbr.rel (0) target = $region73
    $region72: #{tpu_custom_call.1} parent=1 // pred_region
      %s535 = ssub.s32 128, 128
      %536 = vsyncadd [#allocation4], %s535
      %s538 = sshll.u32 [#allocation11], 4
      %s539 = int_to_ptr.vmem [resolvable:$true] %s538
      %541 = dma.vmem_to_hbm [thread:$0]  %s539, 128, %s12, [#allocation4]
    $region73: #{tpu_custom_call.1} parent=1 // pred_fallthru
      _
    // Predicated region
    $region74: #{tpu_custom_call.1} parent=1 // pred_check
      _
    $region75: #{tpu_custom_call.1} parent=1 // pred_check_branch
      %543 = sbr.rel (0) target = $region77
    $region76: #{tpu_custom_call.1} parent=1 // pred_region
      %544 = dma.done [#allocation4], 128
    $region77: #{tpu_custom_call.1} parent=1 // pred_fallthru
      _
    %545 = vsyncpa [#allocation3], 1
    %546 = vsyncpa [#allocation6], 1
    %547 = vsyncpa [#allocation9], 1
    %548 = vsyncpa [#allocation4], 1

</llo_original>
